<compile_context>
chip_gen: v5e
topology: v5e:2x2
jax: 0.10.0
libtpu: 0.0.40
codegen_flags: <defaults>
</compile_context>

<pallas_src>
import functools

import jax
import jax.numpy as jnp
from jax import lax
from jax.experimental import pallas as pl
from jax.experimental.pallas import tpu as pltpu

IGNORE_LABEL = 255


def _ce2d_kernel(logits_ref, target_ref, part_ref, *,
                 ignore_label, hw, tile_hw, num_classes, mask_tail):
    """One (batch, pixel-tile) grid step.

    logits_ref : (1, C, T) block, pixels lane-dense on the last axis.
    target_ref : (1, 1, T) block of integer labels (any <=32-bit int dtype).
    part_ref   : (1, 1, 8, 128) per-tile partial output; sublanes 0-3 carry the
                 partial loss sum, sublanes 4-7 the partial valid-pixel count.
    """
    tgt = target_ref[0].astype(jnp.int32)                    # (1, T)

    valid = (tgt >= 0) & (tgt != ignore_label)                # (1, T)
    if mask_tail:
        t = pl.program_id(1)
        pix = t * tile_hw + lax.broadcasted_iota(jnp.int32, (1, tile_hw), 1)
        valid = valid & (pix < hw)                            # mask ragged tail

    # Pass 1: running max over the (small) class axis, one (1, T) row at a
    # time (f32; rows are upcast individually so no (C, T) temporary exists).
    m = logits_ref[0, 0:1, :].astype(jnp.float32)             # (1, T)
    for ci in range(1, num_classes):
        m = jnp.maximum(m, logits_ref[0, ci:ci + 1, :].astype(jnp.float32))

    # Pass 2: exp-sum and target-class shifted logit, reusing (x - m) per row.
    # picked accumulates (x[tgt] - m) via a per-row select, so
    #   loss = lse - x[tgt] = log(exp_sum) - picked.
    exp_sum = None
    picked = None
    for ci in range(num_classes):
        xs = logits_ref[0, ci:ci + 1, :].astype(jnp.float32) - m   # (1, T)
        e = jnp.exp(xs)
        p = jnp.where(tgt == ci, xs, 0.0)
        exp_sum = e if exp_sum is None else exp_sum + e
        picked = p if picked is None else picked + p

    # Select (not multiply) so OOB / ignored-pixel garbage never poisons sums.
    per_pixel = jnp.where(valid, jnp.log(exp_sum) - picked, 0.0)   # (1, T)
    loss_part = jnp.sum(per_pixel)
    cnt_part = jnp.sum(valid.astype(jnp.float32))

    row = lax.broadcasted_iota(jnp.int32, (1, 1, 8, 128), 2)
    part_ref[...] = jnp.where(row < 4, loss_part, cnt_part)


def _pick_tile_hw(hw, c, logit_itemsize, tgt_itemsize, max_tile=32768):
    """Pick a lane-dense (multiple-of-128) pixel tile, chip-aware.

    Budget covers the double-buffered logits + target input blocks plus the
    per-row f32 temporaries the kernel keeps live (a few (1, T) rows), sized
    conservatively for the smallest-VMEM chip (v7x: 64 MiB / TensorCore).
    """
    try:
        vmem_cap = int(getattr(pltpu.get_tpu_info(), "vmem_capacity_bytes",
                               64 << 20))
    except Exception:
        vmem_cap = 64 << 20
    budget = min(vmem_cap // 3, 20 << 20)
    per_lane = 2 * c * logit_itemsize + 2 * tgt_itemsize + 64
    t = (budget // per_lane) // 128 * 128
    t = max(128, min(max_tile, t))
    return hw if hw <= t else t


def cross_entropy_2d(predict, target, *, ignore_label=IGNORE_LABEL,
                     tile_hw=None):
    """predict: (n, c, h, w) float (f32 or bf16); target: (n, h, w) int.

    Returns the scalar mean masked cross-entropy (0.0 if no valid pixel).
    """
    assert predict.ndim == 4
    assert target.ndim == 3
    n, c, h, w = predict.shape
    assert target.shape == (n, h, w)
    hw = h * w

    # Native NCHW layout kept: contiguous reshapes only (no transpose, no pad).
    logits = predict.reshape(n, c, hw)
    if jnp.issubdtype(target.dtype, jnp.integer) and target.dtype.itemsize <= 4:
        tgt = target.reshape(n, 1, hw)          # keep native (narrow) dtype
    else:
        tgt = target.reshape(n, 1, hw).astype(jnp.int32)

    logit_itemsize = jnp.dtype(logits.dtype).itemsize
    tgt_itemsize = jnp.dtype(tgt.dtype).itemsize

    auto_tile = tile_hw is None
    if auto_tile:
        tile_hw = _pick_tile_hw(hw, c, logit_itemsize, tgt_itemsize)
    else:
        tile_hw = min(int(tile_hw), hw)
    # lane (last) block dim must be a multiple of 128 or the full extent
    assert tile_hw == hw or tile_hw % 128 == 0, tile_hw
    grid_t = pl.cdiv(hw, tile_hw)

    # v7x megacore balance: both grid axes are "parallel"; prefer an even
    # total number of steps so the two TensorCores split the work evenly.
    if auto_tile and hw > 128 and (n * grid_t) % 2 == 1:
        cand = -(-hw // (grid_t + 1))           # ceil
        cand = -(-cand // 128) * 128            # round up to 128 lanes
        cand_grid = pl.cdiv(hw, cand)
        if cand >= 128 and (n * cand_grid) % 2 == 0:
            tile_hw, grid_t = cand, cand_grid

    mask_tail = (hw % tile_hw) != 0

    # Explicit VMEM limit: 2x double-buffered input blocks + in-kernel f32
    # row temporaries + margin; floor 32 MiB (above v5e's 16 MiB scoped
    # default), cap 48 MiB (headroom within v7x's 64 MiB physical VMEM).
    vmem_need = (2 * c * tile_hw * logit_itemsize
                 + 2 * tile_hw * tgt_itemsize
                 + 64 * tile_hw
                 + (4 << 20))
    vmem_limit = int(min(48 << 20, max(32 << 20, vmem_need)))

    kernel = functools.partial(
        _ce2d_kernel, ignore_label=ignore_label, hw=hw, tile_hw=tile_hw,
        num_classes=c, mask_tail=mask_tail)

    parts = pl.pallas_call(
        kernel,
        out_shape=jax.ShapeDtypeStruct((n, grid_t, 8, 128), jnp.float32),
        grid_spec=pltpu.PrefetchScalarGridSpec(
            num_scalar_prefetch=0,
            grid=(n, grid_t),
            in_specs=[
                pl.BlockSpec((1, c, tile_hw), lambda b, t: (b, 0, t)),
                pl.BlockSpec((1, 1, tile_hw), lambda b, t: (b, 0, t)),
            ],
            out_specs=pl.BlockSpec((1, 1, 8, 128), lambda b, t: (b, t, 0, 0)),
        ),
        compiler_params=pltpu.CompilerParams(
            dimension_semantics=("parallel", "parallel"),
            vmem_limit_bytes=vmem_limit),
    )(logits, tgt)

    # Tiny final reduction over per-tile partials in plain JAX.
    loss_sum = jnp.sum(parts[:, :, 0, 0])
    cnt = jnp.sum(parts[:, :, 4, 0])
    return jnp.where(cnt > 0.0, loss_sum / jnp.maximum(cnt, 1.0),
                     jnp.float32(0.0))


def _reference(predict, target, ignore_label=IGNORE_LABEL):
    """Plain-JAX reference mirroring the PyTorch module semantics."""
    n, c, h, w = predict.shape
    logits = jnp.transpose(predict, (0, 2, 3, 1)).reshape(-1, c).astype(jnp.float32)
    tgt = target.reshape(-1).astype(jnp.int32)
    valid = (tgt >= 0) & (tgt != ignore_label)
    lse = jax.nn.logsumexp(logits, axis=-1)
    picked = jnp.take_along_axis(
        logits, jnp.clip(tgt, 0, c - 1)[:, None], axis=-1)[:, 0]
    per = jnp.where(valid, lse - picked, 0.0)
    cnt = jnp.sum(valid.astype(jnp.float32))
    return jnp.where(cnt > 0, jnp.sum(per) / jnp.maximum(cnt, 1.0), 0.0)


if __name__ == "__main__":
    key = jax.random.PRNGKey(0)

    # --- test 1: basic shape, ~20% ignored pixels, auto tile ---------------
    k1, k2, k3, key = jax.random.split(key, 4)
    n, c, h, w = 2, 4, 16, 16
    predict = jax.random.normal(k1, (n, c, h, w), dtype=jnp.float32)
    target = jax.random.randint(k2, (n, h, w), 0, c, dtype=jnp.int32)
    ignore_mask = jax.random.uniform(k3, (n, h, w)) < 0.2
    target = jnp.where(ignore_mask, IGNORE_LABEL, target)

    loss = jax.block_until_ready(cross_entropy_2d(predict, target))
    ref = _reference(predict, target)
    assert jnp.allclose(loss, ref, atol=1e-5, rtol=1e-5), (loss, ref)

    # --- test 2: ragged tail (hw not a multiple of the pixel tile) ---------
    k1, k2, k3, key = jax.random.split(key, 4)
    n2, c2, h2, w2 = 2, 5, 20, 20          # hw = 400, tile = 256 -> partial tile
    predict2 = jax.random.normal(k1, (n2, c2, h2, w2), dtype=jnp.float32)
    target2 = jax.random.randint(k2, (n2, h2, w2), 0, c2, dtype=jnp.int32)
    ignore_mask2 = jax.random.uniform(k3, (n2, h2, w2)) < 0.2
    target2 = jnp.where(ignore_mask2, IGNORE_LABEL, target2)

    loss2 = jax.block_until_ready(cross_entropy_2d(predict2, target2, tile_hw=256))
    ref2 = _reference(predict2, target2)
    assert jnp.allclose(loss2, ref2, atol=1e-5, rtol=1e-5), (loss2, ref2)

    # --- test 3: every pixel ignored -> 0.0 (torch.zeros(1) path) ----------
    k1, key = jax.random.split(key)
    predict3 = jax.random.normal(k1, (1, 4, 8, 8), dtype=jnp.float32)
    target3 = jnp.full((1, 8, 8), IGNORE_LABEL, dtype=jnp.int32)
    loss3 = jax.block_until_ready(cross_entropy_2d(predict3, target3))
    assert jnp.allclose(loss3, 0.0, atol=1e-6), loss3

    # --- test 4: bf16 logits, narrow int16 labels, n=1 (even-grid split) ---
    k1, k2, k3, key = jax.random.split(key, 4)
    n4, c4, h4, w4 = 1, 21, 32, 32
    predict4 = jax.random.normal(k1, (n4, c4, h4, w4), dtype=jnp.bfloat16)
    target4 = jax.random.randint(k2, (n4, h4, w4), 0, c4, dtype=jnp.int32)
    ignore_mask4 = jax.random.uniform(k3, (n4, h4, w4)) < 0.2
    target4 = jnp.where(ignore_mask4, IGNORE_LABEL, target4).astype(jnp.int16)

    loss4 = jax.block_until_ready(cross_entropy_2d(predict4, target4))
    ref4 = _reference(predict4, target4)
    assert jnp.allclose(loss4, ref4, atol=1e-3, rtol=1e-3), (loss4, ref4)

    print("KERNEL_OK")
</pallas_src>

<mosaic_0001>
module attributes {stable_mosaic.version = 11 : i64} {
  func.func @_ce2d_kernel(%arg0: i32, %arg1: i32, %arg2: memref<1x4x256xf32, #tpu.memory_space<vmem>>, %arg3: memref<1x1x256xi32, #tpu.memory_space<vmem>>, %arg4: memref<1x1x8x128xf32, #tpu.memory_space<vmem>>) attributes {dimension_semantics = [#tpu.dimension_semantics<parallel>, #tpu.dimension_semantics<parallel>], iteration_bounds = array<i64: 2, 1>, scalar_prefetch = 0 : i64, scratch_operands = 0 : i64, tpu.core_type = #tpu.core_type<tc>, window_params = [{transform_indices = @transform_0, window_bounds = array<i64: 1, 4, 256>}, {transform_indices = @transform_1, window_bounds = array<i64: 1, 1, 256>}, {transform_indices = @transform_2, window_bounds = array<i64: 1, 1, 8, 128>}]} {
    %c0 = arith.constant 0 : index
    %c0_0 = arith.constant 0 : index
    %c0_1 = arith.constant 0 : index
    %0 = vector.load %arg3[%c0, %c0_0, %c0_1] : memref<1x1x256xi32, #tpu.memory_space<vmem>>, vector<1x1x256xi32>
    %1 = vector.shape_cast %0 : vector<1x1x256xi32> to vector<1x256xi32>
    %c0_i32 = arith.constant 0 : i32
    %2 = vector.broadcast %c0_i32 : i32 to vector<1x256xi32>
    %3 = arith.cmpi sge, %1, %2 : vector<1x256xi32>
    %c255_i32 = arith.constant 255 : i32
    %4 = vector.broadcast %c255_i32 : i32 to vector<1x256xi32>
    %5 = arith.cmpi ne, %1, %4 : vector<1x256xi32>
    %6 = arith.andi %3, %5 : vector<1x256xi1>
    %c0_2 = arith.constant 0 : index
    %c0_3 = arith.constant 0 : index
    %c0_4 = arith.constant 0 : index
    %7 = vector.load %arg2[%c0_2, %c0_3, %c0_4] : memref<1x4x256xf32, #tpu.memory_space<vmem>>, vector<1x1x256xf32>
    %8 = vector.shape_cast %7 : vector<1x1x256xf32> to vector<1x256xf32>
    %c0_5 = arith.constant 0 : index
    %c1 = arith.constant 1 : index
    %c0_6 = arith.constant 0 : index
    %9 = vector.load %arg2[%c0_5, %c1, %c0_6] : memref<1x4x256xf32, #tpu.memory_space<vmem>>, vector<1x1x256xf32>
    %10 = vector.shape_cast %9 : vector<1x1x256xf32> to vector<1x256xf32>
    %11 = arith.maximumf %8, %10 : vector<1x256xf32>
    %c0_7 = arith.constant 0 : index
    %c2 = arith.constant 2 : index
    %c0_8 = arith.constant 0 : index
    %12 = vector.load %arg2[%c0_7, %c2, %c0_8] : memref<1x4x256xf32, #tpu.memory_space<vmem>>, vector<1x1x256xf32>
    %13 = vector.shape_cast %12 : vector<1x1x256xf32> to vector<1x256xf32>
    %14 = arith.maximumf %11, %13 : vector<1x256xf32>
    %c0_9 = arith.constant 0 : index
    %c3 = arith.constant 3 : index
    %c0_10 = arith.constant 0 : index
    %15 = vector.load %arg2[%c0_9, %c3, %c0_10] : memref<1x4x256xf32, #tpu.memory_space<vmem>>, vector<1x1x256xf32>
    %16 = vector.shape_cast %15 : vector<1x1x256xf32> to vector<1x256xf32>
    %17 = arith.maximumf %14, %16 : vector<1x256xf32>
    %c0_11 = arith.constant 0 : index
    %c0_12 = arith.constant 0 : index
    %c0_13 = arith.constant 0 : index
    %18 = vector.load %arg2[%c0_11, %c0_12, %c0_13] : memref<1x4x256xf32, #tpu.memory_space<vmem>>, vector<1x1x256xf32>
    %19 = vector.shape_cast %18 : vector<1x1x256xf32> to vector<1x256xf32>
    %20 = arith.subf %19, %17 : vector<1x256xf32>
    %21 = math.exp %20 : vector<1x256xf32>
    %c0_i32_14 = arith.constant 0 : i32
    %22 = vector.broadcast %c0_i32_14 : i32 to vector<1x256xi32>
    %23 = arith.cmpi eq, %1, %22 : vector<1x256xi32>
    %cst = arith.constant 0.000000e+00 : f32
    %24 = vector.broadcast %cst : f32 to vector<1x256xf32>
    %25 = arith.select %23, %20, %24 : vector<1x256xi1>, vector<1x256xf32>
    %c0_15 = arith.constant 0 : index
    %c1_16 = arith.constant 1 : index
    %c0_17 = arith.constant 0 : index
    %26 = vector.load %arg2[%c0_15, %c1_16, %c0_17] : memref<1x4x256xf32, #tpu.memory_space<vmem>>, vector<1x1x256xf32>
    %27 = vector.shape_cast %26 : vector<1x1x256xf32> to vector<1x256xf32>
    %28 = arith.subf %27, %17 : vector<1x256xf32>
    %29 = math.exp %28 : vector<1x256xf32>
    %c1_i32 = arith.constant 1 : i32
    %30 = vector.broadcast %c1_i32 : i32 to vector<1x256xi32>
    %31 = arith.cmpi eq, %1, %30 : vector<1x256xi32>
    %cst_18 = arith.constant 0.000000e+00 : f32
    %32 = vector.broadcast %cst_18 : f32 to vector<1x256xf32>
    %33 = arith.select %31, %28, %32 : vector<1x256xi1>, vector<1x256xf32>
    %34 = arith.addf %21, %29 : vector<1x256xf32>
    %35 = arith.addf %25, %33 : vector<1x256xf32>
    %c0_19 = arith.constant 0 : index
    %c2_20 = arith.constant 2 : index
    %c0_21 = arith.constant 0 : index
    %36 = vector.load %arg2[%c0_19, %c2_20, %c0_21] : memref<1x4x256xf32, #tpu.memory_space<vmem>>, vector<1x1x256xf32>
    %37 = vector.shape_cast %36 : vector<1x1x256xf32> to vector<1x256xf32>
    %38 = arith.subf %37, %17 : vector<1x256xf32>
    %39 = math.exp %38 : vector<1x256xf32>
    %c2_i32 = arith.constant 2 : i32
    %40 = vector.broadcast %c2_i32 : i32 to vector<1x256xi32>
    %41 = arith.cmpi eq, %1, %40 : vector<1x256xi32>
    %cst_22 = arith.constant 0.000000e+00 : f32
    %42 = vector.broadcast %cst_22 : f32 to vector<1x256xf32>
    %43 = arith.select %41, %38, %42 : vector<1x256xi1>, vector<1x256xf32>
    %44 = arith.addf %34, %39 : vector<1x256xf32>
    %45 = arith.addf %35, %43 : vector<1x256xf32>
    %c0_23 = arith.constant 0 : index
    %c3_24 = arith.constant 3 : index
    %c0_25 = arith.constant 0 : index
    %46 = vector.load %arg2[%c0_23, %c3_24, %c0_25] : memref<1x4x256xf32, #tpu.memory_space<vmem>>, vector<1x1x256xf32>
    %47 = vector.shape_cast %46 : vector<1x1x256xf32> to vector<1x256xf32>
    %48 = arith.subf %47, %17 : vector<1x256xf32>
    %49 = math.exp %48 : vector<1x256xf32>
    %c3_i32 = arith.constant 3 : i32
    %50 = vector.broadcast %c3_i32 : i32 to vector<1x256xi32>
    %51 = arith.cmpi eq, %1, %50 : vector<1x256xi32>
    %cst_26 = arith.constant 0.000000e+00 : f32
    %52 = vector.broadcast %cst_26 : f32 to vector<1x256xf32>
    %53 = arith.select %51, %48, %52 : vector<1x256xi1>, vector<1x256xf32>
    %54 = arith.addf %44, %49 : vector<1x256xf32>
    %55 = arith.addf %45, %53 : vector<1x256xf32>
    %56 = math.log %54 : vector<1x256xf32>
    %57 = arith.subf %56, %55 : vector<1x256xf32>
    %cst_27 = arith.constant 0.000000e+00 : f32
    %58 = vector.broadcast %cst_27 : f32 to vector<1x256xf32>
    %59 = arith.select %6, %57, %58 : vector<1x256xi1>, vector<1x256xf32>
    %60 = vector.shape_cast %59 : vector<1x256xf32> to vector<1x1x256xf32>
    %cst_28 = arith.constant dense<0.000000e+00> : vector<1xf32>
    %61 = vector.multi_reduction <add>, %60, %cst_28 [1, 2] : vector<1x1x256xf32> to vector<1xf32>
    %62 = vector.shape_cast %61 : vector<1xf32> to vector<1x1x1xf32>
    %63 = vector.extract %62[0, 0, 0] : f32 from vector<1x1x1xf32>
    %64 = arith.extui %6 : vector<1x256xi1> to vector<1x256xi32>
    %65 = arith.sitofp %64 : vector<1x256xi32> to vector<1x256xf32>
    %66 = vector.shape_cast %65 : vector<1x256xf32> to vector<1x1x256xf32>
    %cst_29 = arith.constant dense<0.000000e+00> : vector<1xf32>
    %67 = vector.multi_reduction <add>, %66, %cst_29 [1, 2] : vector<1x1x256xf32> to vector<1xf32>
    %68 = vector.shape_cast %67 : vector<1xf32> to vector<1x1x1xf32>
    %69 = vector.extract %68[0, 0, 0] : f32 from vector<1x1x1xf32>
    %70 = tpu.iota {dimensions = array<i32: 2>} : vector<1x1x8x128xi32>
    %c4_i32 = arith.constant 4 : i32
    %71 = vector.broadcast %c4_i32 : i32 to vector<1x1x8x128xi32>
    %72 = arith.cmpi slt, %70, %71 : vector<1x1x8x128xi32>
    %73 = vector.broadcast %63 : f32 to vector<1x1x8x128xf32>
    %74 = vector.broadcast %69 : f32 to vector<1x1x8x128xf32>
    %75 = arith.select %72, %73, %74 : vector<1x1x8x128xi1>, vector<1x1x8x128xf32>
    %c0_30 = arith.constant 0 : index
    %c0_31 = arith.constant 0 : index
    %c0_32 = arith.constant 0 : index
    %c0_33 = arith.constant 0 : index
    %76 = vector.load %arg4[%c0_30, %c0_31, %c0_32, %c0_33] : memref<1x1x8x128xf32, #tpu.memory_space<vmem>>, vector<1x1x8x128xf32>
    tpu.vector_store %arg4[%c0_30, %c0_31, %c0_32, %c0_33], %75 {strides = array<i32>} : memref<1x1x8x128xf32, #tpu.memory_space<vmem>>, vector<1x1x8x128xf32>,
    return
  }
  func.func @transform_0(%arg0: i32, %arg1: i32) -> (i32, i32, i32) {
    %c0_i32 = arith.constant 0 : i32
    %c0_i32_0 = arith.constant 0 : i32
    return %arg0, %c0_i32, %arg1 : i32, i32, i32
  }
  func.func @transform_1(%arg0: i32, %arg1: i32) -> (i32, i32, i32) {
    %c0_i32 = arith.constant 0 : i32
    %c0_i32_0 = arith.constant 0 : i32
    return %arg0, %c0_i32, %arg1 : i32, i32, i32
  }
  func.func @transform_2(%arg0: i32, %arg1: i32) -> (i32, i32, i32, i32) {
    %c0_i32 = arith.constant 0 : i32
    %c0_i32_0 = arith.constant 0 : i32
    %c0_i32_1 = arith.constant 0 : i32
    return %arg0, %arg1, %c0_i32, %c0_i32_0 : i32, i32, i32, i32
  }
}

</mosaic_0001>

<llo_original>
// kernel: tpu_custom_call.1
$region0: #{tpu_custom_call.1}
  #allocation0 [shape = 'u32[]', space=smem, size = 0x4, offset = 0x4, fixed_abs, tag = 'smem constant byte address 0x4 - core index']
  #allocation1 [shape = 'u32[72,128]{1,0:T(1,128)}', space=vmem, size = 0x9000, scoped, tag = 'internal scratch']
  %s0 = inlined_call_operand.hbm [shape: f32[2,4,256], index: 0, kind: input, shape index: {}]
  %s1 = inlined_call_operand.hbm [shape: s32[2,1,256], index: 1, kind: input, shape index: {}]
  %s2 = inlined_call_operand.hbm [shape: f32[2,1,8,128], index: 2, kind: output, shape index: {}]
  %s3 = sld [smem:[#allocation0]]
  $region49: #{tpu_custom_call.1} parent=0
    _
  %s5 = ssub.s32 1, %s3
  %s6 = scalar_select 0, %s5, %s3
  $region1: #{tpu_custom_call.1} parent=0
    #allocation2 [shape = 'u8[8192]{0}', space=vmem, size = 0x2000, scoped, tag = 'input window, operand 0']
    #allocation3 [shape = 's32[2]{0}', space=sflag, size = 0x8, scoped, tag = 'scoped memory for tpu_custom_call.1']
    #allocation4 [shape = 's32[2]{0}', space=sflag, size = 0x8, scoped, tag = 'scoped memory for tpu_custom_call.1']
    #allocation5 [shape = 'u8[2048]{0}', space=vmem, size = 0x800, scoped, tag = 'input window, operand 1']
    #allocation6 [shape = 's32[2]{0}', space=sflag, size = 0x8, scoped, tag = 'scoped memory for tpu_custom_call.1']
    #allocation7 [shape = 'u8[8192]{0}', space=vmem, size = 0x2000, scoped, tag = 'output window, operand 0']
    %7 = vsyncpa [#allocation3], 0
    %s8 = scalar_lea.sflag [#allocation3], 1
    %9 = vsyncpa %s8, 0
    %10 = vsyncpa [#allocation6], 0
    %s11 = scalar_lea.sflag [#allocation6], 1
    %12 = vsyncpa %s11, 0
    %13 = vsyncpa [#allocation4], 0
    %s14 = scalar_lea.sflag [#allocation4], 1
    %15 = vsyncpa %s14, 0
    loop: start=0, step=1, limit=4
    $region2: #{tpu_custom_call.1} parent=1 // loop_pre_header
      _
    $region3: #{tpu_custom_call.1} parent=1 // loop_header
      %s17 = sphi 0, %s21
      %p18 = scmp.ge.s32.totalorder %s17, 4
      %s24 = sphi 0, %s36
      %s25 = sphi 0, %s32
      %s26 = sphi 0, %s24
      %s27 = sphi 0, %s25
      %s28 = sphi 0, %s26
      %s29 = sphi 0, %s27
      %s41 = sphi 0, %s43
      %s44 = sphi 0, %s41
      %s45 = sphi 0, %s44
      %s61 = sphi 0, %s45
      %s69 = sphi 0, %s71
      %s72 = sphi 0, %s69
      %s73 = sphi 0, %s72
      %s89 = sphi 0, %s73
      %s97 = sphi 0, %s99
      %s100 = sphi 0, %s97
      %s101 = sphi 0, %s100
      %s117 = sphi 0, %s101
    $region4: #{tpu_custom_call.1} parent=1 // loop_header_branch
      %20 = sbr.rel (%p18) target = $region8
    $region5: #{tpu_custom_call.1} parent=1 // loop_body
      %s22 = ssub.s32 %s17, 1
      %s23 = ssub.s32 %s17, 2
      %s30 = sadd.s32 1, %s25
      %p31 = scmp.ge.s32.totalorder %s30, 1
      %s32 = scalar_select %p31, 0, %s30
      %s33 = sadd.s32 1, %s24
      %s34 = scalar_select %p31, %s33, %s24
      %p35 = scmp.ge.s32.totalorder %s34, 2
      %s36 = scalar_select %p35, 0, %s34
      %s37 = ssub.s32 %s24, %s36
      %s38 = ssub.s32 %s25, %s32
      %s39 = sor.u32 %s37, %s38
      %p40 = scmp.eq.s32.totalorder %s39, 0
      %s42 = sadd.s32 %s41, 1
      %s43 = scalar_select %p40, %s41, %s42
      %p46 = pneg %p40
      %p47 = scmp.eq.s32.totalorder %s17, 1
      %p48 = por %p46, %p47
      %p49 = scmp.ne.s32.totalorder %s41, %s44
      %p50 = scmp.eq.s32.totalorder %s17, 0
      %p51 = por %p49, %p50
      %p52 = scmp.ne.s32.totalorder %s41, %s44
      %p53 = scmp.eq.s32.totalorder %s22, 1
      %p54 = por %p52, %p53
      %p55 = scmp.ne.s32.totalorder %s44, %s45
      %p56 = scmp.eq.s32.totalorder %s22, 0
      %p57 = por %p55, %p56
      %p58 = scmp.ne.s32.totalorder %s44, %s45
      %p59 = scmp.eq.s32.totalorder %s23, 1
      %p60 = por %p58, %p59
      %p62 = scmp.ne.s32.totalorder %s45, %s61
      %p63 = scmp.eq.s32.totalorder %s23, 0
      %p64 = por %p62, %p63
      %s65 = ssub.s32 %s24, %s36
      %s66 = ssub.s32 %s25, %s32
      %s67 = sor.u32 %s65, %s66
      %p68 = scmp.eq.s32.totalorder %s67, 0
      %s70 = sadd.s32 %s69, 1
      %s71 = scalar_select %p68, %s69, %s70
      %p74 = pneg %p68
      %p75 = scmp.eq.s32.totalorder %s17, 1
      %p76 = por %p74, %p75
      %p77 = scmp.ne.s32.totalorder %s69, %s72
      %p78 = scmp.eq.s32.totalorder %s17, 0
      %p79 = por %p77, %p78
      %p80 = scmp.ne.s32.totalorder %s69, %s72
      %p81 = scmp.eq.s32.totalorder %s22, 1
      %p82 = por %p80, %p81
      %p83 = scmp.ne.s32.totalorder %s72, %s73
      %p84 = scmp.eq.s32.totalorder %s22, 0
      %p85 = por %p83, %p84
      %p86 = scmp.ne.s32.totalorder %s72, %s73
      %p87 = scmp.eq.s32.totalorder %s23, 1
      %p88 = por %p86, %p87
      %p90 = scmp.ne.s32.totalorder %s73, %s89
      %p91 = scmp.eq.s32.totalorder %s23, 0
      %p92 = por %p90, %p91
      %s93 = ssub.s32 %s24, %s36
      %s94 = ssub.s32 %s25, %s32
      %s95 = sor.u32 %s93, %s94
      %p96 = scmp.eq.s32.totalorder %s95, 0
      %s98 = sadd.s32 %s97, 1
      %s99 = scalar_select %p96, %s97, %s98
      %p102 = pneg %p96
      %p103 = scmp.eq.s32.totalorder %s17, 1
      %p104 = por %p102, %p103
      %p105 = scmp.ne.s32.totalorder %s97, %s100
      %p106 = scmp.eq.s32.totalorder %s17, 0
      %p107 = por %p105, %p106
      %p108 = scmp.ne.s32.totalorder %s97, %s100
      %p109 = scmp.eq.s32.totalorder %s22, 1
      %p110 = por %p108, %p109
      %p111 = scmp.ne.s32.totalorder %s100, %s101
      %p112 = scmp.eq.s32.totalorder %s22, 0
      %p113 = por %p111, %p112
      %p114 = scmp.ne.s32.totalorder %s100, %s101
      %p115 = scmp.eq.s32.totalorder %s23, 1
      %p116 = por %p114, %p115
      %p118 = scmp.ne.s32.totalorder %s101, %s117
      %p119 = scmp.eq.s32.totalorder %s23, 0
      %p120 = por %p118, %p119
      %p121 = scmp.le.s32.totalorder 1, %s17
      %p122 = scmp.lt.s32.totalorder %s17, 3
      %p123 = pnand %p121, %p122
      %p124 = pneg %p123
      // Predicated region
      $region9: #{tpu_custom_call.1} parent=5 // pred_check
        _
      $region10: #{tpu_custom_call.1} parent=5 // pred_check_branch
        %126 = sbr.rel (%p123) target = $region12
      $region11: #{tpu_custom_call.1} parent=5 // pred_region
        %s127 = ssub.s32 %s17, 1
      $region12: #{tpu_custom_call.1} parent=5 // pred_fallthru
        _
      %p128 = scmp.lt.s32.totalorder %s17, 2
      // Predicated region
      $region13: #{tpu_custom_call.1} parent=5 // pred_check
        %p129 = pneg %p128
      $region14: #{tpu_custom_call.1} parent=5 // pred_check_branch
        %131 = sbr.rel (%p129) target = $region16
      $region15: #{tpu_custom_call.1} parent=5 // pred_region
        // Predicated region
        $region17: #{tpu_custom_call.1} parent=15 // pred_check
          %p132 = pneg %p51
        $region18: #{tpu_custom_call.1} parent=15 // pred_check_branch
          %134 = sbr.rel (%p132) target = $region20
        $region19: #{tpu_custom_call.1} parent=15 // pred_region
          %s135 = sand.u32 %s41, 1
          %s136 = scalar_lea.sflag [#allocation3], %s135
          %s137 = sand.u32 %s41, 1
          %s138 = smul.addr %s137, 8
          %s139 = scalar_lea.vmem [#allocation2], %s138
          %s140 = smul.u32 2, %s25
          %142 = vsyncadd %s136, 0
          %s143 = smul.addr %s24, 2
          %s144 = sadd.s32 %s140, %s143
          %s145 = smul.addr %s144, 4
          %s146 = scalar_lea.hbm %s0, %s145
          %s148 = sshll.u32 %s146, 4
          %s149 = int_to_ptr.hbm [resolvable:$true] %s148
          %s150 = sshll.u32 %s139, 4
          %s151 = int_to_ptr.vmem [resolvable:$true] %s150
          %153 = dma.hbm_to_vmem [thread:$0]  %s149, 128, %s151, %s136
        $region20: #{tpu_custom_call.1} parent=15 // pred_fallthru
          _
        // Predicated region
        $region21: #{tpu_custom_call.1} parent=15 // pred_check
          %p154 = pneg %p79
        $region22: #{tpu_custom_call.1} parent=15 // pred_check_branch
          %156 = sbr.rel (%p154) target = $region24
        $region23: #{tpu_custom_call.1} parent=15 // pred_region
          %s157 = sand.u32 %s69, 1
          %s158 = scalar_lea.sflag [#allocation6], %s157
          %s159 = sand.u32 %s69, 1
          %s160 = smul.addr %s159, 2
          %s161 = scalar_lea.vmem [#allocation5], %s160
          %s162 = smul.u32 2, %s25
          %164 = vsyncadd %s158, 0
          %s165 = smul.addr %s24, 2
          %s166 = sadd.s32 %s162, %s165
          %s167 = scalar_lea.hbm %s1, %s166
          %s169 = sshll.u32 %s167, 4
          %s170 = int_to_ptr.hbm [resolvable:$true] %s169
          %s171 = sshll.u32 %s161, 4
          %s172 = int_to_ptr.vmem [resolvable:$true] %s171
          %174 = dma.hbm_to_vmem [thread:$0]  %s170, 32, %s172, %s158
        $region24: #{tpu_custom_call.1} parent=15 // pred_fallthru
          _
      $region16: #{tpu_custom_call.1} parent=5 // pred_fallthru
        _
      %p175 = scmp.le.s32.totalorder 1, %s17
      %p176 = scmp.lt.s32.totalorder %s17, 3
      %p177 = pnand %p175, %p176
      %p178 = pneg %p177
      // Predicated region
      $region25: #{tpu_custom_call.1} parent=5 // pred_check
        _
      $region26: #{tpu_custom_call.1} parent=5 // pred_check_branch
        %180 = sbr.rel (%p177) target = $region28
      $region27: #{tpu_custom_call.1} parent=5 // pred_region
        %s181 = ssub.s32 %s17, 1
        %s182 = sand.u32 %s44, 1
        %s183 = scalar_lea.sflag [#allocation3], %s182
        %s184 = sand.u32 %s44, 1
        %s185 = smul.addr %s184, 8
        %s186 = scalar_lea.vmem [#allocation2], %s185
        // Predicated region
        $region29: #{tpu_custom_call.1} parent=27 // pred_check
          %p187 = pneg %p57
        $region30: #{tpu_custom_call.1} parent=27 // pred_check_branch
          %189 = sbr.rel (%p187) target = $region32
        $region31: #{tpu_custom_call.1} parent=27 // pred_region
          %191 = dma.done %s183, 128
        $region32: #{tpu_custom_call.1} parent=27 // pred_fallthru
          _
        %s192 = sand.u32 %s72, 1
        %s193 = scalar_lea.sflag [#allocation6], %s192
        %s194 = sand.u32 %s72, 1
        %s195 = smul.addr %s194, 2
        %s196 = scalar_lea.vmem [#allocation5], %s195
        // Predicated region
        $region33: #{tpu_custom_call.1} parent=27 // pred_check
          %p197 = pneg %p85
        $region34: #{tpu_custom_call.1} parent=27 // pred_check_branch
          %199 = sbr.rel (%p197) target = $region36
        $region35: #{tpu_custom_call.1} parent=27 // pred_region
          %201 = dma.done %s193, 32
        $region36: #{tpu_custom_call.1} parent=27 // pred_fallthru
          _
        %s202 = sand.u32 %s44, 1
        %s203 = scalar_lea.sflag [#allocation3], %s202
        %s204 = sand.u32 %s44, 1
        %s205 = smul.addr %s204, 8
        %s206 = scalar_lea.vmem [#allocation2], %s205
        %p207 = pneg %p57
        %p208 = pneg %p54
        %s209 = sand.u32 %s72, 1
        %s210 = scalar_lea.sflag [#allocation6], %s209
        %s211 = sand.u32 %s72, 1
        %s212 = smul.addr %s211, 2
        %s213 = scalar_lea.vmem [#allocation5], %s212
        %p214 = pneg %p85
        %p215 = pneg %p82
        %p216 = pneg %p113
        %p217 = pneg %p110
        %s218 = sand.u32 %s100, 1
        %s219 = scalar_lea.sflag [#allocation4], %s218
        %s220 = sand.u32 %s100, 1
        %s221 = smul.addr %s220, 8
        %s222 = scalar_lea.vmem [#allocation7], %s221
        %s223 = smul.u32 2, %s27
        %s224 = smul.u32 2, %s27
        %v225 = vld [vmem:[%s196] sm:$0x3]
        %vm226 = vcmp.ge.s32.totalorder %v225, 0
        %vm227 = vcmp.ne.s32.totalorder %v225, 255
        %vm228 = vmand %vm226, %vm227
        %v229 = vld [vmem:[%s186] ss:$4 sm:$0x3]
        %s230 = scalar_lea.vmem %s186, 1 [#allocation2]
        %v231 = vld [vmem:[%s230] ss:$4 sm:$0x3]
        %v232 = vmax.f32 %v229, %v231
        %s233 = scalar_lea.vmem %s186, 2 [#allocation2]
        %v234 = vld [vmem:[%s233] ss:$4 sm:$0x3]
        %v235 = vmax.f32 %v232, %v234
        %s236 = scalar_lea.vmem %s186, 3 [#allocation2]
        %v237 = vld [vmem:[%s236] ss:$4 sm:$0x3]
        %v238 = vmax.f32 %v235, %v237
        %v239 = vsub.f32 %v229, %v238
        %v240 = vmul.f32 %v239, 1.442695
        %v241 = vpow.pop %v240
        %vm242 = vcmp.eq.s32.totalorder %v225, 0
        %v243 = vsel %vm242, %v239, 0.0
        %v244 = vsub.f32 %v231, %v238
        %v245 = vmul.f32 %v244, 1.442695
        %v246 = vpow.pop %v245
        %vm247 = vcmp.eq.s32.totalorder %v225, 1
        %v248 = vsel %vm247, %v244, 0.0
        %v249 = vadd.f32 %v241, %v246
        %v250 = vadd.f32 %v243, %v248
        %v251 = vsub.f32 %v234, %v238
        %v252 = vmul.f32 %v251, 1.442695
        %v253 = vpow.pop %v252
        %vm254 = vcmp.eq.s32.totalorder %v225, 2
        %v255 = vsel %vm254, %v251, 0.0
        %v256 = vadd.f32 %v249, %v253
        %v257 = vadd.f32 %v250, %v255
        %v258 = vsub.f32 %v237, %v238
        %v259 = vmul.f32 %v258, 1.442695
        %v260 = vpow.pop %v259
        %vm261 = vcmp.eq.s32.totalorder %v225, 3
        %v262 = vsel %vm261, %v258, 0.0
        %v263 = vadd.f32 %v256, %v260
        %v264 = vadd.f32 %v257, %v262
        %v265 = vlog2.pop %v263
        %v266 = vmul.f32 %v265, 0.6931472
        %v267 = vsub.f32 %v266, %v264
        %v268 = vsel %vm228, %v267, 0.0
        %v270 = vperm.slane %v268, 0
        %v271 = vperm.slane %v268, 1
        %vm274 = vcmask 1040384
        %v275 = vsel %vm274, %v270, 0.0
        %v276 = vsel %vm274, %v271, 0.0
        %v277 = vadd.f32 %v275, %v276
        %278 = vadd.xlane.f32.xlu0 %v277
        %v279 = vpop.xlane.xlu0 %278
        %v280 = vrot.slane %v279, 4
        %v281 = vadd.f32 %v279, %v280
        %v282 = vrot.slane %v281, 2
        %v283 = vadd.f32 %v281, %v282
        %v284 = vrot.slane %v283, 1
        %v285 = vadd.f32 %v283, %v284
        %s286 = vtos %v285
        %v287 = vsel %vm228, 1, 0
        %v288 = vcvt.s32.f32 %v287
        %v290 = vperm.slane %v288, 0
        %v291 = vperm.slane %v288, 1
        %v294 = vsel %vm274, %v290, 0.0
        %v295 = vsel %vm274, %v291, 0.0
        %v296 = vadd.f32 %v294, %v295
        %297 = vadd.xlane.f32.xlu0 %v296
        %v298 = vpop.xlane.xlu0 %297
        %v299 = vrot.slane %v298, 4
        %v300 = vadd.f32 %v298, %v299
        %v301 = vrot.slane %v300, 2
        %v302 = vadd.f32 %v300, %v301
        %v303 = vrot.slane %v302, 1
        %v304 = vadd.f32 %v302, %v303
        %s305 = vtos %v304
        %v306 = vlaneseq
        %v307 = vshrl.u32 %v306, 7
        %vm308 = vcmp.lt.s32.totalorder %v307, 4
        %v309 = vstv %s286
        %v310 = vstv %s305
        %v311 = vsel %vm308, %v309, %v310
        %312 = vst [vmem:[%s222] sm:$0xff] %v311
        %s313 = sand.u32 %s100, 1
        %s314 = scalar_lea.sflag [#allocation4], %s313
        %s315 = sand.u32 %s100, 1
        %s316 = smul.addr %s315, 8
        %s317 = scalar_lea.vmem [#allocation7], %s316
        // Predicated region
        $region37: #{tpu_custom_call.1} parent=27 // pred_check
          %p318 = pneg %p110
        $region38: #{tpu_custom_call.1} parent=27 // pred_check_branch
          %320 = sbr.rel (%p318) target = $region40
        $region39: #{tpu_custom_call.1} parent=27 // pred_region
          %322 = vsyncadd %s314, 0
          %s323 = sadd.s32 %s27, %s26
          %s324 = smul.addr %s323, 8
          %s325 = scalar_lea.hbm %s2, %s324
          %s327 = sshll.u32 %s317, 4
          %s328 = int_to_ptr.vmem [resolvable:$true] %s327
          %s329 = sshll.u32 %s325, 4
          %s330 = int_to_ptr.hbm [resolvable:$true] %s329
          %332 = dma.vmem_to_hbm [thread:$0]  %s328, 128, %s330, %s314
        $region40: #{tpu_custom_call.1} parent=27 // pred_fallthru
          _
      $region28: #{tpu_custom_call.1} parent=5 // pred_fallthru
        _
      %p333 = scmp.le.s32.totalorder 2, %s17
      // Predicated region
      $region41: #{tpu_custom_call.1} parent=5 // pred_check
        %p334 = pneg %p333
      $region42: #{tpu_custom_call.1} parent=5 // pred_check_branch
        %336 = sbr.rel (%p334) target = $region44
      $region43: #{tpu_custom_call.1} parent=5 // pred_region
        %s337 = ssub.s32 %s17, 2
        // Predicated region
        $region45: #{tpu_custom_call.1} parent=43 // pred_check
          %p338 = pneg %p116
        $region46: #{tpu_custom_call.1} parent=43 // pred_check_branch
          %340 = sbr.rel (%p338) target = $region48
        $region47: #{tpu_custom_call.1} parent=43 // pred_region
          %s341 = sand.u32 %s101, 1
          %s342 = scalar_lea.sflag [#allocation4], %s341
          %s343 = sand.u32 %s101, 1
          %s344 = smul.addr %s343, 8
          %s345 = scalar_lea.vmem [#allocation7], %s344
          %347 = dma.done %s342, 128
        $region48: #{tpu_custom_call.1} parent=43 // pred_fallthru
          _
      $region44: #{tpu_custom_call.1} parent=5 // pred_fallthru
        _
    $region6: #{tpu_custom_call.1} parent=1 // loop_footer
      %s21 = sadd.s32 1, %s17
    $region7: #{tpu_custom_call.1} parent=1 // loop_footer_branch
      %16 = sbr.rel target = $region3
    $region8: #{tpu_custom_call.1} parent=1 // loop_exit
      _
    %348 = vsyncpa [#allocation3], 1
    %s349 = scalar_lea.sflag [#allocation3], 1
    %350 = vsyncpa %s349, 1
    %351 = vsyncpa [#allocation6], 1
    %s352 = scalar_lea.sflag [#allocation6], 1
    %353 = vsyncpa %s352, 1
    %354 = vsyncpa [#allocation4], 1
    %s355 = scalar_lea.sflag [#allocation4], 1
    %356 = vsyncpa %s355, 1

</llo_original>
